<compile_context>
chip_gen: v6e
topology: v6e:2x2x1
jax: 0.10.0
libtpu: 0.0.40
codegen_flags: <defaults>
</compile_context>

<pallas_src>
import functools

import jax
import jax.numpy as jnp
from jax import lax
from jax.experimental import pallas as pl
from jax.experimental.pallas import tpu as pltpu


def lstm_chunk_kernel(x_ref, wih_ref, whh_ref, b_ref, wout_ref, bout_ref,
                      out_ref, xw_sc, h_sc, c_sc, *, t_chunk, b_tile, H):
    """Grid = (batch_tiles [parallel], time_chunks [arbitrary]).

    x_ref:   (t_chunk * b_tile, I) time-major slab for this (batch tile, time chunk)
    out_ref: (b_tile, 1) written only at the final time chunk
    xw_sc:   (t_chunk * b_tile, 4H) scratch for the hoisted input projection
    h_sc/c_sc: (b_tile, H) persistent recurrent state across time chunks
    """
    ti = pl.program_id(1)

    # ---- init h/c at the first time chunk of each batch tile. ----
    @pl.when(ti == 0)
    def _():
        h_sc[...] = jnp.zeros_like(h_sc)
        c_sc[...] = jnp.zeros_like(c_sc)

    # ---- Phase 1: input projection for this chunk, off the recurrent critical path. ----
    # One fused (t_chunk*b_tile, I) @ (I, 4H) MXU matmul; bias added exactly once.
    xw_sc[...] = (jnp.dot(x_ref[...], wih_ref[...],
                          preferred_element_type=jnp.float32)
                  + b_ref[...])

    # ---- Phase 2: serial recurrence over the chunk; h/c stay in vregs via the carry. ----
    whh = whh_ref[...]                              # (H, 4H) hoisted VMEM->vreg load

    def step(t, carry):
        h, c = carry
        row = pl.multiple_of(t * b_tile, b_tile)    # sublane-aligned start
        xw_t = xw_sc[pl.ds(row, b_tile), :]         # (b_tile, 4H)
        gates = xw_t + jnp.dot(h, whh, preferred_element_type=jnp.float32)  # 128 lanes
        # Two full-width EUP passes instead of four narrow 32-lane ones.
        sig = 0.5 * (jnp.tanh(gates * 0.5) + 1.0)   # == sigmoid(gates); valid for i/f/o
        th = jnp.tanh(gates)                        # valid for g
        i_g = sig[:, 0 * H:1 * H]
        f_g = sig[:, 1 * H:2 * H]
        o_g = sig[:, 3 * H:4 * H]
        g_g = th[:, 2 * H:3 * H]
        c_new = f_g * c + i_g * g_g
        h_new = o_g * jnp.tanh(c_new)
        return (h_new, c_new)

    h, c = lax.fori_loop(0, t_chunk, step, (h_sc[...], c_sc[...]),
                         unroll=min(t_chunk, 8))
    h_sc[...] = h
    c_sc[...] = c

    # ---- Epilogue: Linear(H, 1) on h_T as VPU multiply + lane reduction (last chunk). ----
    @pl.when(ti == pl.num_programs(1) - 1)
    def _():
        out_ref[...] = (jnp.sum(h * wout_ref[...], axis=-1, keepdims=True)
                        + bout_ref[...]).astype(out_ref.dtype)


def simple_lstm_forward(x, params, *, b_tile_target=256, t_chunk_target=64):
    """x: (B, T, I) float32 (batch_first, like PyTorch). Returns (B, 1)."""
    w_ih, w_hh, b, w_out, b_out = params
    B, T, I = x.shape
    H = w_hh.shape[0]
    G = 4 * H

    # Pad batch to a multiple of 8 (f32 sublane tile); pick a batch tile that divides it.
    Bp = max(8, ((B + 7) // 8) * 8)
    if Bp != B:
        x = jnp.pad(x, ((0, Bp - B), (0, 0), (0, 0)))
    b_tile = min(Bp, b_tile_target)
    while Bp % b_tile:
        b_tile -= 8
    nb = Bp // b_tile

    # Time chunk must divide T exactly (zero-padding extra steps would corrupt the recurrence).
    t_chunk = min(T, t_chunk_target)
    while T % t_chunk:
        t_chunk -= 1
    nt = T // t_chunk

    # Layout x so each (batch tile, time chunk) is one contiguous (t_chunk*b_tile, I) slab:
    #   (Bp,T,I) -> (T,Bp,I) -> (nt,t_chunk,nb,b_tile,I) -> (nb,nt,t_chunk*b_tile,I)
    # (one-time wrapper-side layout plumbing handled by XLA, not in-kernel compute).
    x_slab = (jnp.transpose(x, (1, 0, 2))
              .reshape(nt, t_chunk, nb, b_tile, I)
              .transpose(2, 0, 1, 3, 4)
              .reshape(nb, nt, t_chunk * b_tile, I))

    kernel = functools.partial(lstm_chunk_kernel, t_chunk=t_chunk, b_tile=b_tile, H=H)

    out = pl.pallas_call(
        kernel,
        out_shape=jax.ShapeDtypeStruct((Bp, 1), jnp.float32),
        grid_spec=pltpu.PrefetchScalarGridSpec(
            num_scalar_prefetch=0,
            grid=(nb, nt),
            in_specs=[
                # streamed per (batch tile, time chunk); leading size-1 dims squeezed
                pl.BlockSpec((None, None, t_chunk * b_tile, I),
                             lambda bi, ti: (bi, ti, 0, 0)),
                # weights: constant block index -> loaded once, stay VMEM-resident
                pl.BlockSpec((I, G), lambda bi, ti: (0, 0)),
                pl.BlockSpec((H, G), lambda bi, ti: (0, 0)),
                pl.BlockSpec((1, G), lambda bi, ti: (0, 0)),
                pl.BlockSpec((1, H), lambda bi, ti: (0, 0)),
                pl.BlockSpec((1, 1), lambda bi, ti: (0, 0)),
            ],
            out_specs=pl.BlockSpec((b_tile, 1), lambda bi, ti: (bi, 0)),
            scratch_shapes=[
                pltpu.VMEM((t_chunk * b_tile, G), jnp.float32),  # per-chunk xw slab
                pltpu.VMEM((b_tile, H), jnp.float32),            # persistent h
                pltpu.VMEM((b_tile, H), jnp.float32),            # persistent c
            ]),
        compiler_params=pltpu.CompilerParams(
            dimension_semantics=("parallel", "arbitrary"),
            vmem_limit_bytes=32 * 1024 * 1024),
    )(x_slab, w_ih, w_hh, b, w_out, b_out)
    return out[:B]


def init_params(key, input_size, hidden_size):
    """Deterministic init mimicking nn.LSTM / nn.Linear uniform(-1/sqrt(H), 1/sqrt(H)).

    Weights are stored gate-fused and pre-transposed:
      w_ih: (I, 4H), w_hh: (H, 4H), b: (1, 4H)   gate order = (i, f, g, o)
      w_out: (1, H), b_out: (1, 1)
    """
    k = 1.0 / jnp.sqrt(hidden_size)
    keys = jax.random.split(key, 6)
    w_ih = jax.random.uniform(keys[0], (input_size, 4 * hidden_size), jnp.float32, -k, k)
    w_hh = jax.random.uniform(keys[1], (hidden_size, 4 * hidden_size), jnp.float32, -k, k)
    b_ih = jax.random.uniform(keys[2], (1, 4 * hidden_size), jnp.float32, -k, k)
    b_hh = jax.random.uniform(keys[3], (1, 4 * hidden_size), jnp.float32, -k, k)
    b = b_ih + b_hh
    w_out = jax.random.uniform(keys[4], (1, hidden_size), jnp.float32, -k, k)
    b_out = jax.random.uniform(keys[5], (1, 1), jnp.float32, -k, k)
    return (w_ih, w_hh, b, w_out, b_out)


def reference_forward(x, params):
    """Pure-JAX reference of the same LSTM + Linear, for correctness check."""
    w_ih, w_hh, b, w_out, b_out = params
    B, T, I = x.shape
    H = w_hh.shape[0]
    h = jnp.zeros((B, H), jnp.float32)
    c = jnp.zeros((B, H), jnp.float32)

    def step(carry, x_t):
        h, c = carry
        gates = x_t @ w_ih + h @ w_hh + b          # (B, 4H)
        i_g = jax.nn.sigmoid(gates[:, 0 * H:1 * H])
        f_g = jax.nn.sigmoid(gates[:, 1 * H:2 * H])
        g_g = jnp.tanh(gates[:, 2 * H:3 * H])
        o_g = jax.nn.sigmoid(gates[:, 3 * H:4 * H])
        c = f_g * c + i_g * g_g
        h = o_g * jnp.tanh(c)
        return (h, c), None

    (h, c), _ = lax.scan(step, (h, c), jnp.transpose(x, (1, 0, 2)))
    return jnp.sum(h * w_out, axis=-1, keepdims=True) + b_out


if __name__ == "__main__":
    B, T, I, H = 2, 8, 4, 32   # batch, seq, input_size, hidden_size

    key = jax.random.PRNGKey(0)
    kx, kp = jax.random.split(key)
    x = jax.random.normal(kx, (B, T, I), jnp.float32)
    params = init_params(kp, I, H)

    y = simple_lstm_forward(x, params)
    jax.block_until_ready(y)

    y_ref = reference_forward(x, params)
    assert y.shape == (B, 1)
    assert jnp.allclose(y, y_ref, rtol=1e-3, atol=1e-3), "mismatch vs reference"

    print("KERNEL_OK")
</pallas_src>

<mosaic_0001>
module attributes {stable_mosaic.version = 11 : i64} {
  func.func @lstm_chunk_kernel(%arg0: i32, %arg1: i32, %arg2: memref<1x1x64x4xf32, #tpu.memory_space<vmem>>, %arg3: memref<4x128xf32, #tpu.memory_space<vmem>>, %arg4: memref<32x128xf32, #tpu.memory_space<vmem>>, %arg5: memref<1x128xf32, #tpu.memory_space<vmem>>, %arg6: memref<1x32xf32, #tpu.memory_space<vmem>>, %arg7: memref<1x1xf32, #tpu.memory_space<vmem>>, %arg8: memref<8x1xf32, #tpu.memory_space<vmem>>, %arg9: memref<64x128xf32, #tpu.memory_space<vmem>>, %arg10: memref<8x32xf32, #tpu.memory_space<vmem>>, %arg11: memref<8x32xf32, #tpu.memory_space<vmem>>) attributes {dimension_semantics = [#tpu.dimension_semantics<parallel>, #tpu.dimension_semantics<arbitrary>], iteration_bounds = array<i64: 1, 1>, scalar_prefetch = 0 : i64, scratch_operands = 3 : i64, tpu.core_type = #tpu.core_type<tc>, window_params = [{transform_indices = @transform_0, window_bounds = array<i64: 1, 1, 64, 4>}, {pipeline_mode = #tpu.pipeline_mode<synchronous>, transform_indices = @transform_1, window_bounds = array<i64: 4, 128>}, {pipeline_mode = #tpu.pipeline_mode<synchronous>, transform_indices = @transform_2, window_bounds = array<i64: 32, 128>}, {pipeline_mode = #tpu.pipeline_mode<synchronous>, transform_indices = @transform_3, window_bounds = array<i64: 1, 128>}, {pipeline_mode = #tpu.pipeline_mode<synchronous>, transform_indices = @transform_4, window_bounds = array<i64: 1, 32>}, {pipeline_mode = #tpu.pipeline_mode<synchronous>, transform_indices = @transform_5, window_bounds = array<i64: 1, 1>}, {transform_indices = @transform_6, window_bounds = array<i64: 8, 1>}]} {
    %c0_i32 = arith.constant 0 : i32
    %0 = arith.cmpi eq, %arg1, %c0_i32 : i32
    %1 = arith.extui %0 : i1 to i32
    %c0_i32_0 = arith.constant 0 : i32
    %2 = arith.cmpi ne, %1, %c0_i32_0 : i32
    scf.if %2 {
      %cst_71 = arith.constant 0.000000e+00 : f32
      %203 = vector.broadcast %cst_71 : f32 to vector<8x32xf32>
      %c0_72 = arith.constant 0 : index
      %c0_73 = arith.constant 0 : index
      %204 = vector.load %arg10[%c0_72, %c0_73] : memref<8x32xf32, #tpu.memory_space<vmem>>, vector<8x32xf32>
      tpu.vector_store %arg10[%c0_72, %c0_73], %203 {strides = array<i32>} : memref<8x32xf32, #tpu.memory_space<vmem>>, vector<8x32xf32>,
      %cst_74 = arith.constant 0.000000e+00 : f32
      %205 = vector.broadcast %cst_74 : f32 to vector<8x32xf32>
      %c0_75 = arith.constant 0 : index
      %c0_76 = arith.constant 0 : index
      %206 = vector.load %arg11[%c0_75, %c0_76] : memref<8x32xf32, #tpu.memory_space<vmem>>, vector<8x32xf32>
      tpu.vector_store %arg11[%c0_75, %c0_76], %205 {strides = array<i32>} : memref<8x32xf32, #tpu.memory_space<vmem>>, vector<8x32xf32>,
    } else {
    }
    %c0 = arith.constant 0 : index
    %c0_1 = arith.constant 0 : index
    %c0_2 = arith.constant 0 : index
    %c0_3 = arith.constant 0 : index
    %3 = vector.load %arg2[%c0, %c0_1, %c0_2, %c0_3] : memref<1x1x64x4xf32, #tpu.memory_space<vmem>>, vector<1x1x64x4xf32>
    %4 = vector.shape_cast %3 : vector<1x1x64x4xf32> to vector<64x4xf32>
    %c0_4 = arith.constant 0 : index
    %c0_5 = arith.constant 0 : index
    %5 = vector.load %arg3[%c0_4, %c0_5] : memref<4x128xf32, #tpu.memory_space<vmem>>, vector<4x128xf32>
    %cst = arith.constant dense<0.000000e+00> : vector<64x128xf32>
    %6 = tpu.matmul %4, %5, %cst {dimension_numbers = #tpu.dot_dimension_numbers<[1], [0], [0], [1], [0, 0, 1, 1], [], []>} : vector<64x4xf32>, vector<4x128xf32>, vector<64x128xf32> -> vector<64x128xf32>
    %c0_6 = arith.constant 0 : index
    %c0_7 = arith.constant 0 : index
    %7 = vector.load %arg5[%c0_6, %c0_7] : memref<1x128xf32, #tpu.memory_space<vmem>>, vector<1x128xf32>
    %8 = vector.broadcast %7 : vector<1x128xf32> to vector<64x128xf32>
    %9 = arith.addf %6, %8 : vector<64x128xf32>
    %c0_8 = arith.constant 0 : index
    %c0_9 = arith.constant 0 : index
    %10 = vector.load %arg9[%c0_8, %c0_9] : memref<64x128xf32, #tpu.memory_space<vmem>>, vector<64x128xf32>
    tpu.vector_store %arg9[%c0_8, %c0_9], %9 {strides = array<i32>} : memref<64x128xf32, #tpu.memory_space<vmem>>, vector<64x128xf32>,
    %c0_10 = arith.constant 0 : index
    %c0_11 = arith.constant 0 : index
    %11 = vector.load %arg4[%c0_10, %c0_11] : memref<32x128xf32, #tpu.memory_space<vmem>>, vector<32x128xf32>
    %c0_12 = arith.constant 0 : index
    %c0_13 = arith.constant 0 : index
    %12 = vector.load %arg10[%c0_12, %c0_13] : memref<8x32xf32, #tpu.memory_space<vmem>>, vector<8x32xf32>
    %c0_14 = arith.constant 0 : index
    %c0_15 = arith.constant 0 : index
    %13 = vector.load %arg11[%c0_14, %c0_15] : memref<8x32xf32, #tpu.memory_space<vmem>>, vector<8x32xf32>
    %c0_i32_16 = arith.constant 0 : i32
    %c8_i32 = arith.constant 8 : i32
    %14 = arith.muli %c0_i32_16, %c8_i32 : i32
    %15 = tpu.assume_multiple %14, 8 : i32
    %16 = arith.index_cast %15 : i32 to index
    %c0_17 = arith.constant 0 : index
    %17 = vector.load %arg9[%16, %c0_17] : memref<64x128xf32, #tpu.memory_space<vmem>>, vector<8x128xf32>
    %cst_18 = arith.constant dense<0.000000e+00> : vector<8x128xf32>
    %18 = tpu.matmul %12, %11, %cst_18 {dimension_numbers = #tpu.dot_dimension_numbers<[1], [0], [0], [1], [0, 0, 1, 1], [], []>} : vector<8x32xf32>, vector<32x128xf32>, vector<8x128xf32> -> vector<8x128xf32>
    %19 = arith.addf %17, %18 : vector<8x128xf32>
    %cst_19 = arith.constant 5.000000e-01 : f32
    %20 = vector.broadcast %cst_19 : f32 to vector<8x128xf32>
    %21 = arith.mulf %19, %20 : vector<8x128xf32>
    %22 = math.tanh %21 : vector<8x128xf32>
    %cst_20 = arith.constant 1.000000e+00 : f32
    %23 = vector.broadcast %cst_20 : f32 to vector<8x128xf32>
    %24 = arith.addf %22, %23 : vector<8x128xf32>
    %cst_21 = arith.constant 5.000000e-01 : f32
    %25 = vector.broadcast %cst_21 : f32 to vector<8x128xf32>
    %26 = arith.mulf %25, %24 : vector<8x128xf32>
    %27 = math.tanh %19 : vector<8x128xf32>
    %28 = vector.extract_strided_slice %26 {offsets = [0, 0], sizes = [8, 32], strides = [1, 1]} : vector<8x128xf32> to vector<8x32xf32>
    %29 = vector.extract_strided_slice %26 {offsets = [0, 32], sizes = [8, 32], strides = [1, 1]} : vector<8x128xf32> to vector<8x32xf32>
    %30 = vector.extract_strided_slice %26 {offsets = [0, 96], sizes = [8, 32], strides = [1, 1]} : vector<8x128xf32> to vector<8x32xf32>
    %31 = vector.extract_strided_slice %27 {offsets = [0, 64], sizes = [8, 32], strides = [1, 1]} : vector<8x128xf32> to vector<8x32xf32>
    %32 = arith.mulf %29, %13 : vector<8x32xf32>
    %33 = arith.mulf %28, %31 : vector<8x32xf32>
    %34 = arith.addf %32, %33 : vector<8x32xf32>
    %35 = math.tanh %34 : vector<8x32xf32>
    %36 = arith.mulf %30, %35 : vector<8x32xf32>
    %c1_i32 = arith.constant 1 : i32
    %c8_i32_22 = arith.constant 8 : i32
    %37 = arith.muli %c1_i32, %c8_i32_22 : i32
    %38 = tpu.assume_multiple %37, 8 : i32
    %39 = arith.index_cast %38 : i32 to index
    %c0_23 = arith.constant 0 : index
    %40 = vector.load %arg9[%39, %c0_23] : memref<64x128xf32, #tpu.memory_space<vmem>>, vector<8x128xf32>
    %cst_24 = arith.constant dense<0.000000e+00> : vector<8x128xf32>
    %41 = tpu.matmul %36, %11, %cst_24 {dimension_numbers = #tpu.dot_dimension_numbers<[1], [0], [0], [1], [0, 0, 1, 1], [], []>} : vector<8x32xf32>, vector<32x128xf32>, vector<8x128xf32> -> vector<8x128xf32>
    %42 = arith.addf %40, %41 : vector<8x128xf32>
    %cst_25 = arith.constant 5.000000e-01 : f32
    %43 = vector.broadcast %cst_25 : f32 to vector<8x128xf32>
    %44 = arith.mulf %42, %43 : vector<8x128xf32>
    %45 = math.tanh %44 : vector<8x128xf32>
    %cst_26 = arith.constant 1.000000e+00 : f32
    %46 = vector.broadcast %cst_26 : f32 to vector<8x128xf32>
    %47 = arith.addf %45, %46 : vector<8x128xf32>
    %cst_27 = arith.constant 5.000000e-01 : f32
    %48 = vector.broadcast %cst_27 : f32 to vector<8x128xf32>
    %49 = arith.mulf %48, %47 : vector<8x128xf32>
    %50 = math.tanh %42 : vector<8x128xf32>
    %51 = vector.extract_strided_slice %49 {offsets = [0, 0], sizes = [8, 32], strides = [1, 1]} : vector<8x128xf32> to vector<8x32xf32>
    %52 = vector.extract_strided_slice %49 {offsets = [0, 32], sizes = [8, 32], strides = [1, 1]} : vector<8x128xf32> to vector<8x32xf32>
    %53 = vector.extract_strided_slice %49 {offsets = [0, 96], sizes = [8, 32], strides = [1, 1]} : vector<8x128xf32> to vector<8x32xf32>
    %54 = vector.extract_strided_slice %50 {offsets = [0, 64], sizes = [8, 32], strides = [1, 1]} : vector<8x128xf32> to vector<8x32xf32>
    %55 = arith.mulf %52, %34 : vector<8x32xf32>
    %56 = arith.mulf %51, %54 : vector<8x32xf32>
    %57 = arith.addf %55, %56 : vector<8x32xf32>
    %58 = math.tanh %57 : vector<8x32xf32>
    %59 = arith.mulf %53, %58 : vector<8x32xf32>
    %c2_i32 = arith.constant 2 : i32
    %c8_i32_28 = arith.constant 8 : i32
    %60 = arith.muli %c2_i32, %c8_i32_28 : i32
    %61 = tpu.assume_multiple %60, 8 : i32
    %62 = arith.index_cast %61 : i32 to index
    %c0_29 = arith.constant 0 : index
    %63 = vector.load %arg9[%62, %c0_29] : memref<64x128xf32, #tpu.memory_space<vmem>>, vector<8x128xf32>
    %cst_30 = arith.constant dense<0.000000e+00> : vector<8x128xf32>
    %64 = tpu.matmul %59, %11, %cst_30 {dimension_numbers = #tpu.dot_dimension_numbers<[1], [0], [0], [1], [0, 0, 1, 1], [], []>} : vector<8x32xf32>, vector<32x128xf32>, vector<8x128xf32> -> vector<8x128xf32>
    %65 = arith.addf %63, %64 : vector<8x128xf32>
    %cst_31 = arith.constant 5.000000e-01 : f32
    %66 = vector.broadcast %cst_31 : f32 to vector<8x128xf32>
    %67 = arith.mulf %65, %66 : vector<8x128xf32>
    %68 = math.tanh %67 : vector<8x128xf32>
    %cst_32 = arith.constant 1.000000e+00 : f32
    %69 = vector.broadcast %cst_32 : f32 to vector<8x128xf32>
    %70 = arith.addf %68, %69 : vector<8x128xf32>
    %cst_33 = arith.constant 5.000000e-01 : f32
    %71 = vector.broadcast %cst_33 : f32 to vector<8x128xf32>
    %72 = arith.mulf %71, %70 : vector<8x128xf32>
    %73 = math.tanh %65 : vector<8x128xf32>
    %74 = vector.extract_strided_slice %72 {offsets = [0, 0], sizes = [8, 32], strides = [1, 1]} : vector<8x128xf32> to vector<8x32xf32>
    %75 = vector.extract_strided_slice %72 {offsets = [0, 32], sizes = [8, 32], strides = [1, 1]} : vector<8x128xf32> to vector<8x32xf32>
    %76 = vector.extract_strided_slice %72 {offsets = [0, 96], sizes = [8, 32], strides = [1, 1]} : vector<8x128xf32> to vector<8x32xf32>
    %77 = vector.extract_strided_slice %73 {offsets = [0, 64], sizes = [8, 32], strides = [1, 1]} : vector<8x128xf32> to vector<8x32xf32>
    %78 = arith.mulf %75, %57 : vector<8x32xf32>
    %79 = arith.mulf %74, %77 : vector<8x32xf32>
    %80 = arith.addf %78, %79 : vector<8x32xf32>
    %81 = math.tanh %80 : vector<8x32xf32>
    %82 = arith.mulf %76, %81 : vector<8x32xf32>
    %c3_i32 = arith.constant 3 : i32
    %c8_i32_34 = arith.constant 8 : i32
    %83 = arith.muli %c3_i32, %c8_i32_34 : i32
    %84 = tpu.assume_multiple %83, 8 : i32
    %85 = arith.index_cast %84 : i32 to index
    %c0_35 = arith.constant 0 : index
    %86 = vector.load %arg9[%85, %c0_35] : memref<64x128xf32, #tpu.memory_space<vmem>>, vector<8x128xf32>
    %cst_36 = arith.constant dense<0.000000e+00> : vector<8x128xf32>
    %87 = tpu.matmul %82, %11, %cst_36 {dimension_numbers = #tpu.dot_dimension_numbers<[1], [0], [0], [1], [0, 0, 1, 1], [], []>} : vector<8x32xf32>, vector<32x128xf32>, vector<8x128xf32> -> vector<8x128xf32>
    %88 = arith.addf %86, %87 : vector<8x128xf32>
    %cst_37 = arith.constant 5.000000e-01 : f32
    %89 = vector.broadcast %cst_37 : f32 to vector<8x128xf32>
    %90 = arith.mulf %88, %89 : vector<8x128xf32>
    %91 = math.tanh %90 : vector<8x128xf32>
    %cst_38 = arith.constant 1.000000e+00 : f32
    %92 = vector.broadcast %cst_38 : f32 to vector<8x128xf32>
    %93 = arith.addf %91, %92 : vector<8x128xf32>
    %cst_39 = arith.constant 5.000000e-01 : f32
    %94 = vector.broadcast %cst_39 : f32 to vector<8x128xf32>
    %95 = arith.mulf %94, %93 : vector<8x128xf32>
    %96 = math.tanh %88 : vector<8x128xf32>
    %97 = vector.extract_strided_slice %95 {offsets = [0, 0], sizes = [8, 32], strides = [1, 1]} : vector<8x128xf32> to vector<8x32xf32>
    %98 = vector.extract_strided_slice %95 {offsets = [0, 32], sizes = [8, 32], strides = [1, 1]} : vector<8x128xf32> to vector<8x32xf32>
    %99 = vector.extract_strided_slice %95 {offsets = [0, 96], sizes = [8, 32], strides = [1, 1]} : vector<8x128xf32> to vector<8x32xf32>
    %100 = vector.extract_strided_slice %96 {offsets = [0, 64], sizes = [8, 32], strides = [1, 1]} : vector<8x128xf32> to vector<8x32xf32>
    %101 = arith.mulf %98, %80 : vector<8x32xf32>
    %102 = arith.mulf %97, %100 : vector<8x32xf32>
    %103 = arith.addf %101, %102 : vector<8x32xf32>
    %104 = math.tanh %103 : vector<8x32xf32>
    %105 = arith.mulf %99, %104 : vector<8x32xf32>
    %c4_i32 = arith.constant 4 : i32
    %c8_i32_40 = arith.constant 8 : i32
    %106 = arith.muli %c4_i32, %c8_i32_40 : i32
    %107 = tpu.assume_multiple %106, 8 : i32
    %108 = arith.index_cast %107 : i32 to index
    %c0_41 = arith.constant 0 : index
    %109 = vector.load %arg9[%108, %c0_41] : memref<64x128xf32, #tpu.memory_space<vmem>>, vector<8x128xf32>
    %cst_42 = arith.constant dense<0.000000e+00> : vector<8x128xf32>
    %110 = tpu.matmul %105, %11, %cst_42 {dimension_numbers = #tpu.dot_dimension_numbers<[1], [0], [0], [1], [0, 0, 1, 1], [], []>} : vector<8x32xf32>, vector<32x128xf32>, vector<8x128xf32> -> vector<8x128xf32>
    %111 = arith.addf %109, %110 : vector<8x128xf32>
    %cst_43 = arith.constant 5.000000e-01 : f32
    %112 = vector.broadcast %cst_43 : f32 to vector<8x128xf32>
    %113 = arith.mulf %111, %112 : vector<8x128xf32>
    %114 = math.tanh %113 : vector<8x128xf32>
    %cst_44 = arith.constant 1.000000e+00 : f32
    %115 = vector.broadcast %cst_44 : f32 to vector<8x128xf32>
    %116 = arith.addf %114, %115 : vector<8x128xf32>
    %cst_45 = arith.constant 5.000000e-01 : f32
    %117 = vector.broadcast %cst_45 : f32 to vector<8x128xf32>
    %118 = arith.mulf %117, %116 : vector<8x128xf32>
    %119 = math.tanh %111 : vector<8x128xf32>
    %120 = vector.extract_strided_slice %118 {offsets = [0, 0], sizes = [8, 32], strides = [1, 1]} : vector<8x128xf32> to vector<8x32xf32>
    %121 = vector.extract_strided_slice %118 {offsets = [0, 32], sizes = [8, 32], strides = [1, 1]} : vector<8x128xf32> to vector<8x32xf32>
    %122 = vector.extract_strided_slice %118 {offsets = [0, 96], sizes = [8, 32], strides = [1, 1]} : vector<8x128xf32> to vector<8x32xf32>
    %123 = vector.extract_strided_slice %119 {offsets = [0, 64], sizes = [8, 32], strides = [1, 1]} : vector<8x128xf32> to vector<8x32xf32>
    %124 = arith.mulf %121, %103 : vector<8x32xf32>
    %125 = arith.mulf %120, %123 : vector<8x32xf32>
    %126 = arith.addf %124, %125 : vector<8x32xf32>
    %127 = math.tanh %126 : vector<8x32xf32>
    %128 = arith.mulf %122, %127 : vector<8x32xf32>
    %c5_i32 = arith.constant 5 : i32
    %c8_i32_46 = arith.constant 8 : i32
    %129 = arith.muli %c5_i32, %c8_i32_46 : i32
    %130 = tpu.assume_multiple %129, 8 : i32
    %131 = arith.index_cast %130 : i32 to index
    %c0_47 = arith.constant 0 : index
    %132 = vector.load %arg9[%131, %c0_47] : memref<64x128xf32, #tpu.memory_space<vmem>>, vector<8x128xf32>
    %cst_48 = arith.constant dense<0.000000e+00> : vector<8x128xf32>
    %133 = tpu.matmul %128, %11, %cst_48 {dimension_numbers = #tpu.dot_dimension_numbers<[1], [0], [0], [1], [0, 0, 1, 1], [], []>} : vector<8x32xf32>, vector<32x128xf32>, vector<8x128xf32> -> vector<8x128xf32>
    %134 = arith.addf %132, %133 : vector<8x128xf32>
    %cst_49 = arith.constant 5.000000e-01 : f32
    %135 = vector.broadcast %cst_49 : f32 to vector<8x128xf32>
    %136 = arith.mulf %134, %135 : vector<8x128xf32>
    %137 = math.tanh %136 : vector<8x128xf32>
    %cst_50 = arith.constant 1.000000e+00 : f32
    %138 = vector.broadcast %cst_50 : f32 to vector<8x128xf32>
    %139 = arith.addf %137, %138 : vector<8x128xf32>
    %cst_51 = arith.constant 5.000000e-01 : f32
    %140 = vector.broadcast %cst_51 : f32 to vector<8x128xf32>
    %141 = arith.mulf %140, %139 : vector<8x128xf32>
    %142 = math.tanh %134 : vector<8x128xf32>
    %143 = vector.extract_strided_slice %141 {offsets = [0, 0], sizes = [8, 32], strides = [1, 1]} : vector<8x128xf32> to vector<8x32xf32>
    %144 = vector.extract_strided_slice %141 {offsets = [0, 32], sizes = [8, 32], strides = [1, 1]} : vector<8x128xf32> to vector<8x32xf32>
    %145 = vector.extract_strided_slice %141 {offsets = [0, 96], sizes = [8, 32], strides = [1, 1]} : vector<8x128xf32> to vector<8x32xf32>
    %146 = vector.extract_strided_slice %142 {offsets = [0, 64], sizes = [8, 32], strides = [1, 1]} : vector<8x128xf32> to vector<8x32xf32>
    %147 = arith.mulf %144, %126 : vector<8x32xf32>
    %148 = arith.mulf %143, %146 : vector<8x32xf32>
    %149 = arith.addf %147, %148 : vector<8x32xf32>
    %150 = math.tanh %149 : vector<8x32xf32>
    %151 = arith.mulf %145, %150 : vector<8x32xf32>
    %c6_i32 = arith.constant 6 : i32
    %c8_i32_52 = arith.constant 8 : i32
    %152 = arith.muli %c6_i32, %c8_i32_52 : i32
    %153 = tpu.assume_multiple %152, 8 : i32
    %154 = arith.index_cast %153 : i32 to index
    %c0_53 = arith.constant 0 : index
    %155 = vector.load %arg9[%154, %c0_53] : memref<64x128xf32, #tpu.memory_space<vmem>>, vector<8x128xf32>
    %cst_54 = arith.constant dense<0.000000e+00> : vector<8x128xf32>
    %156 = tpu.matmul %151, %11, %cst_54 {dimension_numbers = #tpu.dot_dimension_numbers<[1], [0], [0], [1], [0, 0, 1, 1], [], []>} : vector<8x32xf32>, vector<32x128xf32>, vector<8x128xf32> -> vector<8x128xf32>
    %157 = arith.addf %155, %156 : vector<8x128xf32>
    %cst_55 = arith.constant 5.000000e-01 : f32
    %158 = vector.broadcast %cst_55 : f32 to vector<8x128xf32>
    %159 = arith.mulf %157, %158 : vector<8x128xf32>
    %160 = math.tanh %159 : vector<8x128xf32>
    %cst_56 = arith.constant 1.000000e+00 : f32
    %161 = vector.broadcast %cst_56 : f32 to vector<8x128xf32>
    %162 = arith.addf %160, %161 : vector<8x128xf32>
    %cst_57 = arith.constant 5.000000e-01 : f32
    %163 = vector.broadcast %cst_57 : f32 to vector<8x128xf32>
    %164 = arith.mulf %163, %162 : vector<8x128xf32>
    %165 = math.tanh %157 : vector<8x128xf32>
    %166 = vector.extract_strided_slice %164 {offsets = [0, 0], sizes = [8, 32], strides = [1, 1]} : vector<8x128xf32> to vector<8x32xf32>
    %167 = vector.extract_strided_slice %164 {offsets = [0, 32], sizes = [8, 32], strides = [1, 1]} : vector<8x128xf32> to vector<8x32xf32>
    %168 = vector.extract_strided_slice %164 {offsets = [0, 96], sizes = [8, 32], strides = [1, 1]} : vector<8x128xf32> to vector<8x32xf32>
    %169 = vector.extract_strided_slice %165 {offsets = [0, 64], sizes = [8, 32], strides = [1, 1]} : vector<8x128xf32> to vector<8x32xf32>
    %170 = arith.mulf %167, %149 : vector<8x32xf32>
    %171 = arith.mulf %166, %169 : vector<8x32xf32>
    %172 = arith.addf %170, %171 : vector<8x32xf32>
    %173 = math.tanh %172 : vector<8x32xf32>
    %174 = arith.mulf %168, %173 : vector<8x32xf32>
    %c7_i32 = arith.constant 7 : i32
    %c8_i32_58 = arith.constant 8 : i32
    %175 = arith.muli %c7_i32, %c8_i32_58 : i32
    %176 = tpu.assume_multiple %175, 8 : i32
    %177 = arith.index_cast %176 : i32 to index
    %c0_59 = arith.constant 0 : index
    %178 = vector.load %arg9[%177, %c0_59] : memref<64x128xf32, #tpu.memory_space<vmem>>, vector<8x128xf32>
    %cst_60 = arith.constant dense<0.000000e+00> : vector<8x128xf32>
    %179 = tpu.matmul %174, %11, %cst_60 {dimension_numbers = #tpu.dot_dimension_numbers<[1], [0], [0], [1], [0, 0, 1, 1], [], []>} : vector<8x32xf32>, vector<32x128xf32>, vector<8x128xf32> -> vector<8x128xf32>
    %180 = arith.addf %178, %179 : vector<8x128xf32>
    %cst_61 = arith.constant 5.000000e-01 : f32
    %181 = vector.broadcast %cst_61 : f32 to vector<8x128xf32>
    %182 = arith.mulf %180, %181 : vector<8x128xf32>
    %183 = math.tanh %182 : vector<8x128xf32>
    %cst_62 = arith.constant 1.000000e+00 : f32
    %184 = vector.broadcast %cst_62 : f32 to vector<8x128xf32>
    %185 = arith.addf %183, %184 : vector<8x128xf32>
    %cst_63 = arith.constant 5.000000e-01 : f32
    %186 = vector.broadcast %cst_63 : f32 to vector<8x128xf32>
    %187 = arith.mulf %186, %185 : vector<8x128xf32>
    %188 = math.tanh %180 : vector<8x128xf32>
    %189 = vector.extract_strided_slice %187 {offsets = [0, 0], sizes = [8, 32], strides = [1, 1]} : vector<8x128xf32> to vector<8x32xf32>
    %190 = vector.extract_strided_slice %187 {offsets = [0, 32], sizes = [8, 32], strides = [1, 1]} : vector<8x128xf32> to vector<8x32xf32>
    %191 = vector.extract_strided_slice %187 {offsets = [0, 96], sizes = [8, 32], strides = [1, 1]} : vector<8x128xf32> to vector<8x32xf32>
    %192 = vector.extract_strided_slice %188 {offsets = [0, 64], sizes = [8, 32], strides = [1, 1]} : vector<8x128xf32> to vector<8x32xf32>
    %193 = arith.mulf %190, %172 : vector<8x32xf32>
    %194 = arith.mulf %189, %192 : vector<8x32xf32>
    %195 = arith.addf %193, %194 : vector<8x32xf32>
    %196 = math.tanh %195 : vector<8x32xf32>
    %197 = arith.mulf %191, %196 : vector<8x32xf32>
    %c8_i32_64 = arith.constant 8 : i32
    %c0_65 = arith.constant 0 : index
    %c0_66 = arith.constant 0 : index
    %198 = vector.load %arg10[%c0_65, %c0_66] : memref<8x32xf32, #tpu.memory_space<vmem>>, vector<8x32xf32>
    tpu.vector_store %arg10[%c0_65, %c0_66], %197 {strides = array<i32>} : memref<8x32xf32, #tpu.memory_space<vmem>>, vector<8x32xf32>,
    %c0_67 = arith.constant 0 : index
    %c0_68 = arith.constant 0 : index
    %199 = vector.load %arg11[%c0_67, %c0_68] : memref<8x32xf32, #tpu.memory_space<vmem>>, vector<8x32xf32>
    tpu.vector_store %arg11[%c0_67, %c0_68], %195 {strides = array<i32>} : memref<8x32xf32, #tpu.memory_space<vmem>>, vector<8x32xf32>,
    %c0_i32_69 = arith.constant 0 : i32
    %200 = arith.cmpi eq, %arg1, %c0_i32_69 : i32
    %201 = arith.extui %200 : i1 to i32
    %c0_i32_70 = arith.constant 0 : i32
    %202 = arith.cmpi ne, %201, %c0_i32_70 : i32
    scf.if %202 {
      %c0_71 = arith.constant 0 : index
      %c0_72 = arith.constant 0 : index
      %203 = vector.load %arg6[%c0_71, %c0_72] : memref<1x32xf32, #tpu.memory_space<vmem>>, vector<1x32xf32>
      %204 = vector.broadcast %203 : vector<1x32xf32> to vector<8x32xf32>
      %205 = arith.mulf %197, %204 : vector<8x32xf32>
      %cst_73 = arith.constant dense<0.000000e+00> : vector<8xf32>
      %206 = vector.multi_reduction <add>, %205, %cst_73 [1] : vector<8x32xf32> to vector<8xf32>
      %207 = vector.shape_cast %206 : vector<8xf32> to vector<8x1xf32>
      %c0_74 = arith.constant 0 : index
      %c0_75 = arith.constant 0 : index
      %208 = vector.load %arg7[%c0_74, %c0_75] : memref<1x1xf32, #tpu.memory_space<vmem>>, vector<1x1xf32>
      %209 = vector.broadcast %208 : vector<1x1xf32> to vector<8x1xf32>
      %210 = arith.addf %207, %209 : vector<8x1xf32>
      %c0_76 = arith.constant 0 : index
      %c0_77 = arith.constant 0 : index
      %211 = vector.load %arg8[%c0_76, %c0_77] : memref<8x1xf32, #tpu.memory_space<vmem>>, vector<8x1xf32>
      tpu.vector_store %arg8[%c0_76, %c0_77], %210 {strides = array<i32>} : memref<8x1xf32, #tpu.memory_space<vmem>>, vector<8x1xf32>,
    } else {
    }
    return
  }
  func.func @transform_0(%arg0: i32, %arg1: i32) -> (i32, i32, i32, i32) {
    %c0_i32 = arith.constant 0 : i32
    %c0_i32_0 = arith.constant 0 : i32
    %c0_i32_1 = arith.constant 0 : i32
    return %arg0, %arg1, %c0_i32, %c0_i32_0 : i32, i32, i32, i32
  }
  func.func @transform_1(%arg0: i32, %arg1: i32) -> (i32, i32) {
    %c0_i32 = arith.constant 0 : i32
    %c0_i32_0 = arith.constant 0 : i32
    %c0_i32_1 = arith.constant 0 : i32
    return %c0_i32, %c0_i32_0 : i32, i32
  }
  func.func @transform_2(%arg0: i32, %arg1: i32) -> (i32, i32) {
    %c0_i32 = arith.constant 0 : i32
    %c0_i32_0 = arith.constant 0 : i32
    %c0_i32_1 = arith.constant 0 : i32
    return %c0_i32, %c0_i32_0 : i32, i32
  }
  func.func @transform_3(%arg0: i32, %arg1: i32) -> (i32, i32) {
    %c0_i32 = arith.constant 0 : i32
    %c0_i32_0 = arith.constant 0 : i32
    %c0_i32_1 = arith.constant 0 : i32
    return %c0_i32, %c0_i32_0 : i32, i32
  }
  func.func @transform_4(%arg0: i32, %arg1: i32) -> (i32, i32) {
    %c0_i32 = arith.constant 0 : i32
    %c0_i32_0 = arith.constant 0 : i32
    %c0_i32_1 = arith.constant 0 : i32
    return %c0_i32, %c0_i32_0 : i32, i32
  }
  func.func @transform_5(%arg0: i32, %arg1: i32) -> (i32, i32) {
    %c0_i32 = arith.constant 0 : i32
    %c0_i32_0 = arith.constant 0 : i32
    %c0_i32_1 = arith.constant 0 : i32
    return %c0_i32, %c0_i32_0 : i32, i32
  }
  func.func @transform_6(%arg0: i32, %arg1: i32) -> (i32, i32) {
    %c0_i32 = arith.constant 0 : i32
    %c0_i32_0 = arith.constant 0 : i32
    return %arg0, %c0_i32 : i32, i32
  }
}

</mosaic_0001>

<llo_original>
// kernel: tpu_custom_call.1
$region0: #{tpu_custom_call.1}
  #allocation0 [shape = 'u32[]', space=smem, size = 0x4, offset = 0x4, fixed_abs, tag = 'smem constant byte address 0x4 - core index']
  #allocation1 [shape = 'u32[144,128]{1,0:T(1,128)}', space=vmem, size = 0x12000, scoped, tag = 'internal scratch']
  #allocation2 [shape = 'f32[64,128]{1,0:T(8,128)}', space=vmem, size = 0x8000, scoped, tag = 'scratch operand']
  #allocation3 [shape = 'f32[8,32]{1,0:T(8,128)}', space=vmem, size = 0x1000, scoped, tag = 'scratch operand']
  #allocation4 [shape = 'f32[8,32]{1,0:T(8,128)}', space=vmem, size = 0x1000, scoped, tag = 'scratch operand']
  #allocation5 [shape = 'f32[1,1]{1,0:T(1,128)S(1)}', space=vmem, size = 0x200, scoped, tag = 'scoped memory for tpu_custom_call.1']
  %s0 = inlined_call_operand.vmem [shape: f32[1,1,64,4], index: 0, kind: input, shape index: {}]
  %s1 = inlined_call_operand.vmem [shape: f32[4,128], index: 1, kind: input, shape index: {}]
  %s2 = inlined_call_operand.vmem [shape: f32[32,128], index: 2, kind: input, shape index: {}]
  %s3 = inlined_call_operand.vmem [shape: f32[1,128], index: 3, kind: input, shape index: {}]
  %s4 = inlined_call_operand.vmem [shape: f32[1,32], index: 4, kind: input, shape index: {}]
  %s5 = inlined_call_operand.<no memory space> [shape: f32[1,1], index: 5, kind: input, shape index: {}]
  %s6 = inlined_call_operand.vmem [shape: f32[8,1], index: 6, kind: output, shape index: {}]
  %s7 = sld [smem:[#allocation0]]
  $region42: #{tpu_custom_call.1} parent=0
    _
  %s9 = ssub.s32 1, %s7
  %s10 = scalar_select 0, %s9, %s7
  %v11 = vstv %s5
  %12 = vst [vmem:[#allocation5] sm:$0x1] %v11
  // Predicated region
  $region2: #{tpu_custom_call.1} parent=0 // pred_check
    _
  $region3: #{tpu_custom_call.1} parent=0 // pred_check_branch
    %14 = sbr.rel (0) target = $region5
  $region4: #{tpu_custom_call.1} parent=0 // pred_region
    _
  $region5: #{tpu_custom_call.1} parent=0 // pred_fallthru
    _
  // Predicated region
  $region6: #{tpu_custom_call.1} parent=0 // pred_check
    _
  $region7: #{tpu_custom_call.1} parent=0 // pred_check_branch
    %16 = sbr.rel (0) target = $region9
  $region8: #{tpu_custom_call.1} parent=0 // pred_region
    _
  $region9: #{tpu_custom_call.1} parent=0 // pred_fallthru
    _
  // Predicated region
  $region10: #{tpu_custom_call.1} parent=0 // pred_check
    _
  $region11: #{tpu_custom_call.1} parent=0 // pred_check_branch
    %18 = sbr.rel (0) target = $region13
  $region12: #{tpu_custom_call.1} parent=0 // pred_region
    _
  $region13: #{tpu_custom_call.1} parent=0 // pred_fallthru
    _
  // Predicated region
  $region14: #{tpu_custom_call.1} parent=0 // pred_check
    _
  $region15: #{tpu_custom_call.1} parent=0 // pred_check_branch
    %20 = sbr.rel (0) target = $region17
  $region16: #{tpu_custom_call.1} parent=0 // pred_region
    _
  $region17: #{tpu_custom_call.1} parent=0 // pred_fallthru
    _
  // Predicated region
  $region18: #{tpu_custom_call.1} parent=0 // pred_check
    _
  $region19: #{tpu_custom_call.1} parent=0 // pred_check_branch
    %22 = sbr.rel (0) target = $region21
  $region20: #{tpu_custom_call.1} parent=0 // pred_region
    _
  $region21: #{tpu_custom_call.1} parent=0 // pred_fallthru
    _
  // Predicated region
  $region22: #{tpu_custom_call.1} parent=0 // pred_check
    _
  $region23: #{tpu_custom_call.1} parent=0 // pred_check_branch
    %24 = sbr.rel (0) target = $region25
  $region24: #{tpu_custom_call.1} parent=0 // pred_region
    _
  $region25: #{tpu_custom_call.1} parent=0 // pred_fallthru
    _
  %p25 = scmp.eq.s32.totalorder 0, 0
  // Predicated region
  $region26: #{tpu_custom_call.1} parent=0 // pred_check
    %p26 = pneg %p25
  $region27: #{tpu_custom_call.1} parent=0 // pred_check_branch
    %28 = sbr.rel (%p26) target = $region29
  $region28: #{tpu_custom_call.1} parent=0 // pred_region
    %vm29 = vcmask 261120
    %30 = vst.msk [vmem:[#allocation3] sm:$0xff] %vm29, 0.0
    %31 = vst.msk [vmem:[#allocation4] sm:$0xff] %vm29, 0.0
  $region29: #{tpu_custom_call.1} parent=0 // pred_fallthru
    _
  %v32 = vld [vmem:[%s0] sm:$0xff]
  %v33 = vld [vmem:[%s0 + $0x8] sm:$0xff]
  %v34 = vld [vmem:[%s0 + $0x10] sm:$0xff]
  %v35 = vld [vmem:[%s0 + $0x18] sm:$0xff]
  %v36 = vld [vmem:[%s0 + $0x20] sm:$0xff]
  %v37 = vld [vmem:[%s0 + $0x28] sm:$0xff]
  %v38 = vld [vmem:[%s0 + $0x30] sm:$0xff]
  %v39 = vld [vmem:[%s0 + $0x38] sm:$0xff]
  %v40 = vld [vmem:[%s1] sm:$0xf]
  %v41 = vld [vmem:[%s3] sm:$0x1]
  %v43 = vlaneseq
  %v44 = vshrl.u32 %v43, 7
  %v45 = vsub.s32 0, %v44
  %v46 = vrot.slane %v41, %v45
  %vm48 = vcmask 31744
  %v50 = vsel %vm48, %v32, 0
  %v53 = vsel %vm48, %v33, 0
  %v56 = vsel %vm48, %v34, 0
  %v59 = vsel %vm48, %v35, 0
  %v62 = vsel %vm48, %v36, 0
  %v65 = vsel %vm48, %v37, 0
  %v68 = vsel %vm48, %v38, 0
  %v71 = vsel %vm48, %v39, 0
  %vm73 = vcmask 1043456
  %v75 = vsel %vm73, %v40, 0
  %77 = vmatprep.subr.mxu0 0.0
  %78 = vmatpush1.msra.mxu0 0.0
  %79 = vmatprep.subr.mxu0 0.0
  %80 = vmatpush1.msra.mxu0 0.0
  %81 = vmatprep.subr.mxu0 0.0
  %82 = vmatpush1.msra.mxu0 0.0
  %83 = vmatprep.subr.mxu0 0.0
  %84 = vmatpush1.msra.mxu0 0.0
  %85 = vmatprep.subr.mxu0 0.0
  %86 = vmatpush1.msra.mxu0 0.0
  %87 = vmatprep.subr.mxu0 0.0
  %88 = vmatpush1.msra.mxu0 0.0
  %89 = vmatprep.subr.mxu0 0.0
  %90 = vmatpush1.msra.mxu0 0.0
  %91 = vmatprep.subr.mxu0 0.0
  %92 = vmatpush1.msra.mxu0 0.0
  %93 = vmatprep.subr.mxu0 0.0
  %94 = vmatpush1.msra.mxu0 0.0
  %95 = vmatprep.subr.mxu0 0.0
  %96 = vmatpush1.msra.mxu0 0.0
  %97 = vmatprep.subr.mxu0 0.0
  %98 = vmatpush1.msra.mxu0 0.0
  %99 = vmatprep.subr.mxu0 0.0
  %100 = vmatpush1.msra.mxu0 0.0
  %101 = vmatprep.subr.mxu0 0.0
  %102 = vmatpush1.msra.mxu0 0.0
  %103 = vmatprep.subr.mxu0 0.0
  %104 = vmatpush1.msra.mxu0 0.0
  %105 = vmatprep.subr.mxu0 0.0
  %106 = vmatpush1.msra.mxu0 0.0
  %107 = vmatprep.subr.mxu0 0.0
  %108 = vmatpush1.msra.mxu0 %v75
  %109 = vmatprep.subr.mxu0 0.0
  %110 = vmatpush2.msra.mxu0 0.0
  %111 = vmatprep.subr.mxu0 0.0
  %112 = vmatpush2.msra.mxu0 0.0
  %113 = vmatprep.subr.mxu0 0.0
  %114 = vmatpush2.msra.mxu0 0.0
  %115 = vmatprep.subr.mxu0 0.0
  %116 = vmatpush2.msra.mxu0 0.0
  %117 = vmatprep.subr.mxu0 0.0
  %118 = vmatpush2.msra.mxu0 0.0
  %119 = vmatprep.subr.mxu0 0.0
  %120 = vmatpush2.msra.mxu0 0.0
  %121 = vmatprep.subr.mxu0 0.0
  %122 = vmatpush2.msra.mxu0 0.0
  %123 = vmatprep.subr.mxu0 0.0
  %124 = vmatpush2.msra.mxu0 0.0
  %125 = vmatprep.subr.mxu0 0.0
  %126 = vmatpush2.msra.mxu0 0.0
  %127 = vmatprep.subr.mxu0 0.0
  %128 = vmatpush2.msra.mxu0 0.0
  %129 = vmatprep.subr.mxu0 0.0
  %130 = vmatpush2.msra.mxu0 0.0
  %131 = vmatprep.subr.mxu0 0.0
  %132 = vmatpush2.msra.mxu0 0.0
  %133 = vmatprep.subr.mxu0 0.0
  %134 = vmatpush2.msra.mxu0 0.0
  %135 = vmatprep.subr.mxu0 0.0
  %136 = vmatpush2.msra.mxu0 0.0
  %137 = vmatprep.subr.mxu0 0.0
  %138 = vmatpush2.msra.mxu0 0.0
  %139 = vmatprep.subr.mxu0 0.0
  %140 = vmatpush2.msra.mxu0 0.0
  %141 = vmatprep.mubr.f32.mxu0 0.0
  %142 = vmatmul.mubr.f32.gmra.mxu0 %v50
  %v143 = vpop.f32.mrf.mxu0
  %v144 = vadd.f32 %v46, %v143
  %v145 = vpop.f32.mrf.mxu0
  %146 = vmatprep.mubr.f32.mxu0 0.0
  %147 = vmatmul.mubr.f32.gmra.mxu0 %v53
  %v148 = vpop.f32.mrf.mxu0
  %v149 = vadd.f32 %v46, %v148
  %v150 = vpop.f32.mrf.mxu0
  %151 = vmatprep.mubr.f32.mxu0 0.0
  %152 = vmatmul.mubr.f32.gmra.mxu0 %v56
  %v153 = vpop.f32.mrf.mxu0
  %v154 = vadd.f32 %v46, %v153
  %v155 = vpop.f32.mrf.mxu0
  %156 = vmatprep.mubr.f32.mxu0 0.0
  %157 = vmatmul.mubr.f32.gmra.mxu0 %v59
  %v158 = vpop.f32.mrf.mxu0
  %v159 = vadd.f32 %v46, %v158
  %v160 = vpop.f32.mrf.mxu0
  %161 = vmatprep.mubr.f32.mxu0 0.0
  %162 = vmatmul.mubr.f32.gmra.mxu0 %v62
  %v163 = vpop.f32.mrf.mxu0
  %v164 = vadd.f32 %v46, %v163
  %v165 = vpop.f32.mrf.mxu0
  %166 = vmatprep.mubr.f32.mxu0 0.0
  %167 = vmatmul.mubr.f32.gmra.mxu0 %v65
  %v168 = vpop.f32.mrf.mxu0
  %v169 = vadd.f32 %v46, %v168
  %v170 = vpop.f32.mrf.mxu0
  %171 = vmatprep.mubr.f32.mxu0 0.0
  %172 = vmatmul.mubr.f32.gmra.mxu0 %v68
  %v173 = vpop.f32.mrf.mxu0
  %v174 = vadd.f32 %v46, %v173
  %v175 = vpop.f32.mrf.mxu0
  %176 = vmatprep.mubr.f32.mxu0 0.0
  %177 = vmatmul.mubr.f32.gmra.mxu0 %v71
  %v178 = vpop.f32.mrf.mxu0
  %v179 = vadd.f32 %v46, %v178
  %v180 = vpop.f32.mrf.mxu0
  %181 = vdwg.mxu0
  %182 = vst [vmem:[#allocation2] sm:$0xff] %v144
  %183 = vst [vmem:[#allocation2 + $0x8] sm:$0xff] %v149
  %184 = vst [vmem:[#allocation2 + $0x10] sm:$0xff] %v154
  %185 = vst [vmem:[#allocation2 + $0x18] sm:$0xff] %v159
  %186 = vst [vmem:[#allocation2 + $0x20] sm:$0xff] %v164
  %187 = vst [vmem:[#allocation2 + $0x28] sm:$0xff] %v169
  %188 = vst [vmem:[#allocation2 + $0x30] sm:$0xff] %v174
  %189 = vst [vmem:[#allocation2 + $0x38] sm:$0xff] %v179
  %v190 = vld [vmem:[%s2] sm:$0xff]
  %v191 = vld [vmem:[%s2 + $0x8] sm:$0xff]
  %v192 = vld [vmem:[%s2 + $0x10] sm:$0xff]
  %v193 = vld [vmem:[%s2 + $0x18] sm:$0xff]
  %v194 = vld [vmem:[#allocation3] sm:$0xff]
  %v195 = vld [vmem:[#allocation4] sm:$0xff]
  %v196 = vld [vmem:[#allocation2] sm:$0xff]
  %vm197 = vcmask 261120
  %v199 = vsel %vm197, %v194, 0
  %201 = vmatprep.subr.mxu0 0.0
  %202 = vmatpush1.msra.mxu0 0.0
  %203 = vmatprep.subr.mxu0 0.0
  %204 = vmatpush1.msra.mxu0 0.0
  %205 = vmatprep.subr.mxu0 0.0
  %206 = vmatpush1.msra.mxu0 0.0
  %207 = vmatprep.subr.mxu0 0.0
  %208 = vmatpush1.msra.mxu0 0.0
  %209 = vmatprep.subr.mxu0 0.0
  %210 = vmatpush1.msra.mxu0 0.0
  %211 = vmatprep.subr.mxu0 0.0
  %212 = vmatpush1.msra.mxu0 0.0
  %213 = vmatprep.subr.mxu0 0.0
  %214 = vmatpush1.msra.mxu0 0.0
  %215 = vmatprep.subr.mxu0 0.0
  %216 = vmatpush1.msra.mxu0 0.0
  %217 = vmatprep.subr.mxu0 0.0
  %218 = vmatpush1.msra.mxu0 0.0
  %219 = vmatprep.subr.mxu0 0.0
  %220 = vmatpush1.msra.mxu0 0.0
  %221 = vmatprep.subr.mxu0 0.0
  %222 = vmatpush1.msra.mxu0 0.0
  %223 = vmatprep.subr.mxu0 0.0
  %224 = vmatpush1.msra.mxu0 0.0
  %225 = vmatprep.subr.mxu0 0.0
  %226 = vmatpush1.msra.mxu0 %v193
  %227 = vmatprep.subr.mxu0 0.0
  %228 = vmatpush1.msra.mxu0 %v192
  %229 = vmatprep.subr.mxu0 0.0
  %230 = vmatpush1.msra.mxu0 %v191
  %231 = vmatprep.subr.mxu0 0.0
  %232 = vmatpush1.msra.mxu0 %v190
  %233 = vmatprep.subr.mxu0 0.0
  %234 = vmatpush2.msra.mxu0 0.0
  %235 = vmatprep.subr.mxu0 0.0
  %236 = vmatpush2.msra.mxu0 0.0
  %237 = vmatprep.subr.mxu0 0.0
  %238 = vmatpush2.msra.mxu0 0.0
  %239 = vmatprep.subr.mxu0 0.0
  %240 = vmatpush2.msra.mxu0 0.0
  %241 = vmatprep.subr.mxu0 0.0
  %242 = vmatpush2.msra.mxu0 0.0
  %243 = vmatprep.subr.mxu0 0.0
  %244 = vmatpush2.msra.mxu0 0.0
  %245 = vmatprep.subr.mxu0 0.0
  %246 = vmatpush2.msra.mxu0 0.0
  %247 = vmatprep.subr.mxu0 0.0
  %248 = vmatpush2.msra.mxu0 0.0
  %249 = vmatprep.subr.mxu0 0.0
  %250 = vmatpush2.msra.mxu0 0.0
  %251 = vmatprep.subr.mxu0 0.0
  %252 = vmatpush2.msra.mxu0 0.0
  %253 = vmatprep.subr.mxu0 0.0
  %254 = vmatpush2.msra.mxu0 0.0
  %255 = vmatprep.subr.mxu0 0.0
  %256 = vmatpush2.msra.mxu0 0.0
  %257 = vmatprep.subr.mxu0 0.0
  %258 = vmatpush2.msra.mxu0 0.0
  %259 = vmatprep.subr.mxu0 0.0
  %260 = vmatpush2.msra.mxu0 0.0
  %261 = vmatprep.subr.mxu0 0.0
  %262 = vmatpush2.msra.mxu0 0.0
  %263 = vmatprep.subr.mxu0 0.0
  %264 = vmatpush2.msra.mxu0 0.0
  %265 = vmatprep.mubr.f32.mxu0 0.0
  %266 = vmatmul.mubr.f32.gmra.mxu0 %v199
  %v267 = vpop.f32.mrf.mxu0
  %v268 = vadd.f32 0.0, %v267
  %v269 = vpop.f32.mrf.mxu0
  %270 = vdwg.mxu0
  %v271 = vadd.f32 %v196, %v268
  %v272 = vmul.f32 %v271, 0.5
  %v273 = vtanh.pop %v272
  %v274 = vadd.f32 %v273, 1.0
  %v275 = vmul.f32 %v274, 0.5
  %v276 = vtanh.pop %v271
  %278 = vrot.lane.b32.xlu0 %v195, 32
  %v279 = vpop.permute.xlu0 %278
  %v281 = vmul.f32 %v275, %v279
  %283 = vrot.lane.b32.xlu0 %v276, 64
  %v284 = vpop.permute.xlu0 %283
  %v286 = vmul.f32 %v275, %v284
  %288 = vrot.lane.b32.xlu0 %v286, 32
  %v289 = vpop.permute.xlu0 %288
  %v291 = vadd.f32 %v281, %v289
  %v292 = vtanh.pop %v291
  %294 = vrot.lane.b32.xlu0 %v292, 64
  %v295 = vpop.permute.xlu0 %294
  %v297 = vmul.f32 %v275, %v295
  %s298 = scalar_lea.vmem [#allocation2], 8
  %v299 = vld [vmem:[%s298] sm:$0xff]
  %301 = vrot.lane.b32.xlu0 %v297, 32
  %v302 = vpop.permute.xlu0 %301
  %v303 = vsel %vm197, %v302, 0
  %305 = vmatprep.subr.mxu0 0.0
  %306 = vmatpush1.msra.mxu0 0.0
  %307 = vmatprep.subr.mxu0 0.0
  %308 = vmatpush1.msra.mxu0 0.0
  %309 = vmatprep.subr.mxu0 0.0
  %310 = vmatpush1.msra.mxu0 0.0
  %311 = vmatprep.subr.mxu0 0.0
  %312 = vmatpush1.msra.mxu0 0.0
  %313 = vmatprep.subr.mxu0 0.0
  %314 = vmatpush1.msra.mxu0 0.0
  %315 = vmatprep.subr.mxu0 0.0
  %316 = vmatpush1.msra.mxu0 0.0
  %317 = vmatprep.subr.mxu0 0.0
  %318 = vmatpush1.msra.mxu0 0.0
  %319 = vmatprep.subr.mxu0 0.0
  %320 = vmatpush1.msra.mxu0 0.0
  %321 = vmatprep.subr.mxu0 0.0
  %322 = vmatpush1.msra.mxu0 0.0
  %323 = vmatprep.subr.mxu0 0.0
  %324 = vmatpush1.msra.mxu0 0.0
  %325 = vmatprep.subr.mxu0 0.0
  %326 = vmatpush1.msra.mxu0 0.0
  %327 = vmatprep.subr.mxu0 0.0
  %328 = vmatpush1.msra.mxu0 0.0
  %329 = vmatprep.subr.mxu0 0.0
  %330 = vmatpush1.msra.mxu0 %v193
  %331 = vmatprep.subr.mxu0 0.0
  %332 = vmatpush1.msra.mxu0 %v192
  %333 = vmatprep.subr.mxu0 0.0
  %334 = vmatpush1.msra.mxu0 %v191
  %335 = vmatprep.subr.mxu0 0.0
  %336 = vmatpush1.msra.mxu0 %v190
  %337 = vmatprep.subr.mxu0 0.0
  %338 = vmatpush2.msra.mxu0 0.0
  %339 = vmatprep.subr.mxu0 0.0
  %340 = vmatpush2.msra.mxu0 0.0
  %341 = vmatprep.subr.mxu0 0.0
  %342 = vmatpush2.msra.mxu0 0.0
  %343 = vmatprep.subr.mxu0 0.0
  %344 = vmatpush2.msra.mxu0 0.0
  %345 = vmatprep.subr.mxu0 0.0
  %346 = vmatpush2.msra.mxu0 0.0
  %347 = vmatprep.subr.mxu0 0.0
  %348 = vmatpush2.msra.mxu0 0.0
  %349 = vmatprep.subr.mxu0 0.0
  %350 = vmatpush2.msra.mxu0 0.0
  %351 = vmatprep.subr.mxu0 0.0
  %352 = vmatpush2.msra.mxu0 0.0
  %353 = vmatprep.subr.mxu0 0.0
  %354 = vmatpush2.msra.mxu0 0.0
  %355 = vmatprep.subr.mxu0 0.0
  %356 = vmatpush2.msra.mxu0 0.0
  %357 = vmatprep.subr.mxu0 0.0
  %358 = vmatpush2.msra.mxu0 0.0
  %359 = vmatprep.subr.mxu0 0.0
  %360 = vmatpush2.msra.mxu0 0.0
  %361 = vmatprep.subr.mxu0 0.0
  %362 = vmatpush2.msra.mxu0 0.0
  %363 = vmatprep.subr.mxu0 0.0
  %364 = vmatpush2.msra.mxu0 0.0
  %365 = vmatprep.subr.mxu0 0.0
  %366 = vmatpush2.msra.mxu0 0.0
  %367 = vmatprep.subr.mxu0 0.0
  %368 = vmatpush2.msra.mxu0 0.0
  %369 = vmatprep.mubr.f32.mxu0 0.0
  %370 = vmatmul.mubr.f32.gmra.mxu0 %v303
  %v371 = vpop.f32.mrf.mxu0
  %v372 = vadd.f32 0.0, %v371
  %v373 = vpop.f32.mrf.mxu0
  %374 = vdwg.mxu0
  %v375 = vadd.f32 %v299, %v372
  %v376 = vmul.f32 %v375, 0.5
  %v377 = vtanh.pop %v376
  %v378 = vadd.f32 %v377, 1.0
  %v379 = vmul.f32 %v378, 0.5
  %v380 = vtanh.pop %v375
  %v381 = vmul.f32 %v379, %v291
  %383 = vrot.lane.b32.xlu0 %v380, 64
  %v384 = vpop.permute.xlu0 %383
  %v386 = vmul.f32 %v379, %v384
  %388 = vrot.lane.b32.xlu0 %v386, 32
  %v389 = vpop.permute.xlu0 %388
  %v391 = vadd.f32 %v381, %v389
  %v392 = vtanh.pop %v391
  %394 = vrot.lane.b32.xlu0 %v392, 64
  %v395 = vpop.permute.xlu0 %394
  %v397 = vmul.f32 %v379, %v395
  %s398 = scalar_lea.vmem [#allocation2], 16
  %v399 = vld [vmem:[%s398] sm:$0xff]
  %401 = vrot.lane.b32.xlu0 %v397, 32
  %v402 = vpop.permute.xlu0 %401
  %v403 = vsel %vm197, %v402, 0
  %405 = vmatprep.subr.mxu0 0.0
  %406 = vmatpush1.msra.mxu0 0.0
  %407 = vmatprep.subr.mxu0 0.0
  %408 = vmatpush1.msra.mxu0 0.0
  %409 = vmatprep.subr.mxu0 0.0
  %410 = vmatpush1.msra.mxu0 0.0
  %411 = vmatprep.subr.mxu0 0.0
  %412 = vmatpush1.msra.mxu0 0.0
  %413 = vmatprep.subr.mxu0 0.0
  %414 = vmatpush1.msra.mxu0 0.0
  %415 = vmatprep.subr.mxu0 0.0
  %416 = vmatpush1.msra.mxu0 0.0
  %417 = vmatprep.subr.mxu0 0.0
  %418 = vmatpush1.msra.mxu0 0.0
  %419 = vmatprep.subr.mxu0 0.0
  %420 = vmatpush1.msra.mxu0 0.0
  %421 = vmatprep.subr.mxu0 0.0
  %422 = vmatpush1.msra.mxu0 0.0
  %423 = vmatprep.subr.mxu0 0.0
  %424 = vmatpush1.msra.mxu0 0.0
  %425 = vmatprep.subr.mxu0 0.0
  %426 = vmatpush1.msra.mxu0 0.0
  %427 = vmatprep.subr.mxu0 0.0
  %428 = vmatpush1.msra.mxu0 0.0
  %429 = vmatprep.subr.mxu0 0.0
  %430 = vmatpush1.msra.mxu0 %v193
  %431 = vmatprep.subr.mxu0 0.0
  %432 = vmatpush1.msra.mxu0 %v192
  %433 = vmatprep.subr.mxu0 0.0
  %434 = vmatpush1.msra.mxu0 %v191
  %435 = vmatprep.subr.mxu0 0.0
  %436 = vmatpush1.msra.mxu0 %v190
  %437 = vmatprep.subr.mxu0 0.0
  %438 = vmatpush2.msra.mxu0 0.0
  %439 = vmatprep.subr.mxu0 0.0
  %440 = vmatpush2.msra.mxu0 0.0
  %441 = vmatprep.subr.mxu0 0.0
  %442 = vmatpush2.msra.mxu0 0.0
  %443 = vmatprep.subr.mxu0 0.0
  %444 = vmatpush2.msra.mxu0 0.0
  %445 = vmatprep.subr.mxu0 0.0
  %446 = vmatpush2.msra.mxu0 0.0
  %447 = vmatprep.subr.mxu0 0.0
  %448 = vmatpush2.msra.mxu0 0.0
  %449 = vmatprep.subr.mxu0 0.0
  %450 = vmatpush2.msra.mxu0 0.0
  %451 = vmatprep.subr.mxu0 0.0
  %452 = vmatpush2.msra.mxu0 0.0
  %453 = vmatprep.subr.mxu0 0.0
  %454 = vmatpush2.msra.mxu0 0.0
  %455 = vmatprep.subr.mxu0 0.0
  %456 = vmatpush2.msra.mxu0 0.0
  %457 = vmatprep.subr.mxu0 0.0
  %458 = vmatpush2.msra.mxu0 0.0
  %459 = vmatprep.subr.mxu0 0.0
  %460 = vmatpush2.msra.mxu0 0.0
  %461 = vmatprep.subr.mxu0 0.0
  %462 = vmatpush2.msra.mxu0 0.0
  %463 = vmatprep.subr.mxu0 0.0
  %464 = vmatpush2.msra.mxu0 0.0
  %465 = vmatprep.subr.mxu0 0.0
  %466 = vmatpush2.msra.mxu0 0.0
  %467 = vmatprep.subr.mxu0 0.0
  %468 = vmatpush2.msra.mxu0 0.0
  %469 = vmatprep.mubr.f32.mxu0 0.0
  %470 = vmatmul.mubr.f32.gmra.mxu0 %v403
  %v471 = vpop.f32.mrf.mxu0
  %v472 = vadd.f32 0.0, %v471
  %v473 = vpop.f32.mrf.mxu0
  %474 = vdwg.mxu0
  %v475 = vadd.f32 %v399, %v472
  %v476 = vmul.f32 %v475, 0.5
  %v477 = vtanh.pop %v476
  %v478 = vadd.f32 %v477, 1.0
  %v479 = vmul.f32 %v478, 0.5
  %v480 = vtanh.pop %v475
  %v481 = vmul.f32 %v479, %v391
  %483 = vrot.lane.b32.xlu0 %v480, 64
  %v484 = vpop.permute.xlu0 %483
  %v486 = vmul.f32 %v479, %v484
  %488 = vrot.lane.b32.xlu0 %v486, 32
  %v489 = vpop.permute.xlu0 %488
  %v491 = vadd.f32 %v481, %v489
  %v492 = vtanh.pop %v491
  %494 = vrot.lane.b32.xlu0 %v492, 64
  %v495 = vpop.permute.xlu0 %494
  %v497 = vmul.f32 %v479, %v495
  %s498 = scalar_lea.vmem [#allocation2], 24
  %v499 = vld [vmem:[%s498] sm:$0xff]
  %501 = vrot.lane.b32.xlu0 %v497, 32
  %v502 = vpop.permute.xlu0 %501
  %v503 = vsel %vm197, %v502, 0
  %505 = vmatprep.subr.mxu0 0.0
  %506 = vmatpush1.msra.mxu0 0.0
  %507 = vmatprep.subr.mxu0 0.0
  %508 = vmatpush1.msra.mxu0 0.0
  %509 = vmatprep.subr.mxu0 0.0
  %510 = vmatpush1.msra.mxu0 0.0
  %511 = vmatprep.subr.mxu0 0.0
  %512 = vmatpush1.msra.mxu0 0.0
  %513 = vmatprep.subr.mxu0 0.0
  %514 = vmatpush1.msra.mxu0 0.0
  %515 = vmatprep.subr.mxu0 0.0
  %516 = vmatpush1.msra.mxu0 0.0
  %517 = vmatprep.subr.mxu0 0.0
  %518 = vmatpush1.msra.mxu0 0.0
  %519 = vmatprep.subr.mxu0 0.0
  %520 = vmatpush1.msra.mxu0 0.0
  %521 = vmatprep.subr.mxu0 0.0
  %522 = vmatpush1.msra.mxu0 0.0
  %523 = vmatprep.subr.mxu0 0.0
  %524 = vmatpush1.msra.mxu0 0.0
  %525 = vmatprep.subr.mxu0 0.0
  %526 = vmatpush1.msra.mxu0 0.0
  %527 = vmatprep.subr.mxu0 0.0
  %528 = vmatpush1.msra.mxu0 0.0
  %529 = vmatprep.subr.mxu0 0.0
  %530 = vmatpush1.msra.mxu0 %v193
  %531 = vmatprep.subr.mxu0 0.0
  %532 = vmatpush1.msra.mxu0 %v192
  %533 = vmatprep.subr.mxu0 0.0
  %534 = vmatpush1.msra.mxu0 %v191
  %535 = vmatprep.subr.mxu0 0.0
  %536 = vmatpush1.msra.mxu0 %v190
  %537 = vmatprep.subr.mxu0 0.0
  %538 = vmatpush2.msra.mxu0 0.0
  %539 = vmatprep.subr.mxu0 0.0
  %540 = vmatpush2.msra.mxu0 0.0
  %541 = vmatprep.subr.mxu0 0.0
  %542 = vmatpush2.msra.mxu0 0.0
  %543 = vmatprep.subr.mxu0 0.0
  %544 = vmatpush2.msra.mxu0 0.0
  %545 = vmatprep.subr.mxu0 0.0
  %546 = vmatpush2.msra.mxu0 0.0
  %547 = vmatprep.subr.mxu0 0.0
  %548 = vmatpush2.msra.mxu0 0.0
  %549 = vmatprep.subr.mxu0 0.0
  %550 = vmatpush2.msra.mxu0 0.0
  %551 = vmatprep.subr.mxu0 0.0
  %552 = vmatpush2.msra.mxu0 0.0
  %553 = vmatprep.subr.mxu0 0.0
  %554 = vmatpush2.msra.mxu0 0.0
  %555 = vmatprep.subr.mxu0 0.0
  %556 = vmatpush2.msra.mxu0 0.0
  %557 = vmatprep.subr.mxu0 0.0
  %558 = vmatpush2.msra.mxu0 0.0
  %559 = vmatprep.subr.mxu0 0.0
  %560 = vmatpush2.msra.mxu0 0.0
  %561 = vmatprep.subr.mxu0 0.0
  %562 = vmatpush2.msra.mxu0 0.0
  %563 = vmatprep.subr.mxu0 0.0
  %564 = vmatpush2.msra.mxu0 0.0
  %565 = vmatprep.subr.mxu0 0.0
  %566 = vmatpush2.msra.mxu0 0.0
  %567 = vmatprep.subr.mxu0 0.0
  %568 = vmatpush2.msra.mxu0 0.0
  %569 = vmatprep.mubr.f32.mxu0 0.0
  %570 = vmatmul.mubr.f32.gmra.mxu0 %v503
  %v571 = vpop.f32.mrf.mxu0
  %v572 = vadd.f32 0.0, %v571
  %v573 = vpop.f32.mrf.mxu0
  %574 = vdwg.mxu0
  %v575 = vadd.f32 %v499, %v572
  %v576 = vmul.f32 %v575, 0.5
  %v577 = vtanh.pop %v576
  %v578 = vadd.f32 %v577, 1.0
  %v579 = vmul.f32 %v578, 0.5
  %v580 = vtanh.pop %v575
  %v581 = vmul.f32 %v579, %v491
  %583 = vrot.lane.b32.xlu0 %v580, 64
  %v584 = vpop.permute.xlu0 %583
  %v586 = vmul.f32 %v579, %v584
  %588 = vrot.lane.b32.xlu0 %v586, 32
  %v589 = vpop.permute.xlu0 %588
  %v591 = vadd.f32 %v581, %v589
  %v592 = vtanh.pop %v591
  %594 = vrot.lane.b32.xlu0 %v592, 64
  %v595 = vpop.permute.xlu0 %594
  %v597 = vmul.f32 %v579, %v595
  %s598 = scalar_lea.vmem [#allocation2], 32
  %v599 = vld [vmem:[%s598] sm:$0xff]
  %601 = vrot.lane.b32.xlu0 %v597, 32
  %v602 = vpop.permute.xlu0 %601
  %v603 = vsel %vm197, %v602, 0
  %605 = vmatprep.subr.mxu0 0.0
  %606 = vmatpush1.msra.mxu0 0.0
  %607 = vmatprep.subr.mxu0 0.0
  %608 = vmatpush1.msra.mxu0 0.0
  %609 = vmatprep.subr.mxu0 0.0
  %610 = vmatpush1.msra.mxu0 0.0
  %611 = vmatprep.subr.mxu0 0.0
  %612 = vmatpush1.msra.mxu0 0.0
  %613 = vmatprep.subr.mxu0 0.0
  %614 = vmatpush1.msra.mxu0 0.0
  %615 = vmatprep.subr.mxu0 0.0
  %616 = vmatpush1.msra.mxu0 0.0
  %617 = vmatprep.subr.mxu0 0.0
  %618 = vmatpush1.msra.mxu0 0.0
  %619 = vmatprep.subr.mxu0 0.0
  %620 = vmatpush1.msra.mxu0 0.0
  %621 = vmatprep.subr.mxu0 0.0
  %622 = vmatpush1.msra.mxu0 0.0
  %623 = vmatprep.subr.mxu0 0.0
  %624 = vmatpush1.msra.mxu0 0.0
  %625 = vmatprep.subr.mxu0 0.0
  %626 = vmatpush1.msra.mxu0 0.0
  %627 = vmatprep.subr.mxu0 0.0
  %628 = vmatpush1.msra.mxu0 0.0
  %629 = vmatprep.subr.mxu0 0.0
  %630 = vmatpush1.msra.mxu0 %v193
  %631 = vmatprep.subr.mxu0 0.0
  %632 = vmatpush1.msra.mxu0 %v192
  %633 = vmatprep.subr.mxu0 0.0
  %634 = vmatpush1.msra.mxu0 %v191
  %635 = vmatprep.subr.mxu0 0.0
  %636 = vmatpush1.msra.mxu0 %v190
  %637 = vmatprep.subr.mxu0 0.0
  %638 = vmatpush2.msra.mxu0 0.0
  %639 = vmatprep.subr.mxu0 0.0
  %640 = vmatpush2.msra.mxu0 0.0
  %641 = vmatprep.subr.mxu0 0.0
  %642 = vmatpush2.msra.mxu0 0.0
  %643 = vmatprep.subr.mxu0 0.0
  %644 = vmatpush2.msra.mxu0 0.0
  %645 = vmatprep.subr.mxu0 0.0
  %646 = vmatpush2.msra.mxu0 0.0
  %647 = vmatprep.subr.mxu0 0.0
  %648 = vmatpush2.msra.mxu0 0.0
  %649 = vmatprep.subr.mxu0 0.0
  %650 = vmatpush2.msra.mxu0 0.0
  %651 = vmatprep.subr.mxu0 0.0
  %652 = vmatpush2.msra.mxu0 0.0
  %653 = vmatprep.subr.mxu0 0.0
  %654 = vmatpush2.msra.mxu0 0.0
  %655 = vmatprep.subr.mxu0 0.0
  %656 = vmatpush2.msra.mxu0 0.0
  %657 = vmatprep.subr.mxu0 0.0
  %658 = vmatpush2.msra.mxu0 0.0
  %659 = vmatprep.subr.mxu0 0.0
  %660 = vmatpush2.msra.mxu0 0.0
  %661 = vmatprep.subr.mxu0 0.0
  %662 = vmatpush2.msra.mxu0 0.0
  %663 = vmatprep.subr.mxu0 0.0
  %664 = vmatpush2.msra.mxu0 0.0
  %665 = vmatprep.subr.mxu0 0.0
  %666 = vmatpush2.msra.mxu0 0.0
  %667 = vmatprep.subr.mxu0 0.0
  %668 = vmatpush2.msra.mxu0 0.0
  %669 = vmatprep.mubr.f32.mxu0 0.0
  %670 = vmatmul.mubr.f32.gmra.mxu0 %v603
  %v671 = vpop.f32.mrf.mxu0
  %v672 = vadd.f32 0.0, %v671
  %v673 = vpop.f32.mrf.mxu0
  %674 = vdwg.mxu0
  %v675 = vadd.f32 %v599, %v672
  %v676 = vmul.f32 %v675, 0.5
  %v677 = vtanh.pop %v676
  %v678 = vadd.f32 %v677, 1.0
  %v679 = vmul.f32 %v678, 0.5
  %v680 = vtanh.pop %v675
  %v681 = vmul.f32 %v679, %v591
  %683 = vrot.lane.b32.xlu0 %v680, 64
  %v684 = vpop.permute.xlu0 %683
  %v686 = vmul.f32 %v679, %v684
  %688 = vrot.lane.b32.xlu0 %v686, 32
  %v689 = vpop.permute.xlu0 %688
  %v691 = vadd.f32 %v681, %v689
  %v692 = vtanh.pop %v691
  %694 = vrot.lane.b32.xlu0 %v692, 64
  %v695 = vpop.permute.xlu0 %694
  %v697 = vmul.f32 %v679, %v695
  %s698 = scalar_lea.vmem [#allocation2], 40
  %v699 = vld [vmem:[%s698] sm:$0xff]
  %701 = vrot.lane.b32.xlu0 %v697, 32
  %v702 = vpop.permute.xlu0 %701
  %v703 = vsel %vm197, %v702, 0
  %705 = vmatprep.subr.mxu0 0.0
  %706 = vmatpush1.msra.mxu0 0.0
  %707 = vmatprep.subr.mxu0 0.0
  %708 = vmatpush1.msra.mxu0 0.0
  %709 = vmatprep.subr.mxu0 0.0
  %710 = vmatpush1.msra.mxu0 0.0
  %711 = vmatprep.subr.mxu0 0.0
  %712 = vmatpush1.msra.mxu0 0.0
  %713 = vmatprep.subr.mxu0 0.0
  %714 = vmatpush1.msra.mxu0 0.0
  %715 = vmatprep.subr.mxu0 0.0
  %716 = vmatpush1.msra.mxu0 0.0
  %717 = vmatprep.subr.mxu0 0.0
  %718 = vmatpush1.msra.mxu0 0.0
  %719 = vmatprep.subr.mxu0 0.0
  %720 = vmatpush1.msra.mxu0 0.0
  %721 = vmatprep.subr.mxu0 0.0
  %722 = vmatpush1.msra.mxu0 0.0
  %723 = vmatprep.subr.mxu0 0.0
  %724 = vmatpush1.msra.mxu0 0.0
  %725 = vmatprep.subr.mxu0 0.0
  %726 = vmatpush1.msra.mxu0 0.0
  %727 = vmatprep.subr.mxu0 0.0
  %728 = vmatpush1.msra.mxu0 0.0
  %729 = vmatprep.subr.mxu0 0.0
  %730 = vmatpush1.msra.mxu0 %v193
  %731 = vmatprep.subr.mxu0 0.0
  %732 = vmatpush1.msra.mxu0 %v192
  %733 = vmatprep.subr.mxu0 0.0
  %734 = vmatpush1.msra.mxu0 %v191
  %735 = vmatprep.subr.mxu0 0.0
  %736 = vmatpush1.msra.mxu0 %v190
  %737 = vmatprep.subr.mxu0 0.0
  %738 = vmatpush2.msra.mxu0 0.0
  %739 = vmatprep.subr.mxu0 0.0
  %740 = vmatpush2.msra.mxu0 0.0
  %741 = vmatprep.subr.mxu0 0.0
  %742 = vmatpush2.msra.mxu0 0.0
  %743 = vmatprep.subr.mxu0 0.0
  %744 = vmatpush2.msra.mxu0 0.0
  %745 = vmatprep.subr.mxu0 0.0
  %746 = vmatpush2.msra.mxu0 0.0
  %747 = vmatprep.subr.mxu0 0.0
  %748 = vmatpush2.msra.mxu0 0.0
  %749 = vmatprep.subr.mxu0 0.0
  %750 = vmatpush2.msra.mxu0 0.0
  %751 = vmatprep.subr.mxu0 0.0
  %752 = vmatpush2.msra.mxu0 0.0
  %753 = vmatprep.subr.mxu0 0.0
  %754 = vmatpush2.msra.mxu0 0.0
  %755 = vmatprep.subr.mxu0 0.0
  %756 = vmatpush2.msra.mxu0 0.0
  %757 = vmatprep.subr.mxu0 0.0
  %758 = vmatpush2.msra.mxu0 0.0
  %759 = vmatprep.subr.mxu0 0.0
  %760 = vmatpush2.msra.mxu0 0.0
  %761 = vmatprep.subr.mxu0 0.0
  %762 = vmatpush2.msra.mxu0 0.0
  %763 = vmatprep.subr.mxu0 0.0
  %764 = vmatpush2.msra.mxu0 0.0
  %765 = vmatprep.subr.mxu0 0.0
  %766 = vmatpush2.msra.mxu0 0.0
  %767 = vmatprep.subr.mxu0 0.0
  %768 = vmatpush2.msra.mxu0 0.0
  %769 = vmatprep.mubr.f32.mxu0 0.0
  %770 = vmatmul.mubr.f32.gmra.mxu0 %v703
  %v771 = vpop.f32.mrf.mxu0
  %v772 = vadd.f32 0.0, %v771
  %v773 = vpop.f32.mrf.mxu0
  %774 = vdwg.mxu0
  %v775 = vadd.f32 %v699, %v772
  %v776 = vmul.f32 %v775, 0.5
  %v777 = vtanh.pop %v776
  %v778 = vadd.f32 %v777, 1.0
  %v779 = vmul.f32 %v778, 0.5
  %v780 = vtanh.pop %v775
  %v781 = vmul.f32 %v779, %v691
  %783 = vrot.lane.b32.xlu0 %v780, 64
  %v784 = vpop.permute.xlu0 %783
  %v786 = vmul.f32 %v779, %v784
  %788 = vrot.lane.b32.xlu0 %v786, 32
  %v789 = vpop.permute.xlu0 %788
  %v791 = vadd.f32 %v781, %v789
  %v792 = vtanh.pop %v791
  %794 = vrot.lane.b32.xlu0 %v792, 64
  %v795 = vpop.permute.xlu0 %794
  %v797 = vmul.f32 %v779, %v795
  %s798 = scalar_lea.vmem [#allocation2], 48
  %v799 = vld [vmem:[%s798] sm:$0xff]
  %801 = vrot.lane.b32.xlu0 %v797, 32
  %v802 = vpop.permute.xlu0 %801
  %v803 = vsel %vm197, %v802, 0
  %805 = vmatprep.subr.mxu0 0.0
  %806 = vmatpush1.msra.mxu0 0.0
  %807 = vmatprep.subr.mxu0 0.0
  %808 = vmatpush1.msra.mxu0 0.0
  %809 = vmatprep.subr.mxu0 0.0
  %810 = vmatpush1.msra.mxu0 0.0
  %811 = vmatprep.subr.mxu0 0.0
  %812 = vmatpush1.msra.mxu0 0.0
  %813 = vmatprep.subr.mxu0 0.0
  %814 = vmatpush1.msra.mxu0 0.0
  %815 = vmatprep.subr.mxu0 0.0
  %816 = vmatpush1.msra.mxu0 0.0
  %817 = vmatprep.subr.mxu0 0.0
  %818 = vmatpush1.msra.mxu0 0.0
  %819 = vmatprep.subr.mxu0 0.0
  %820 = vmatpush1.msra.mxu0 0.0
  %821 = vmatprep.subr.mxu0 0.0
  %822 = vmatpush1.msra.mxu0 0.0
  %823 = vmatprep.subr.mxu0 0.0
  %824 = vmatpush1.msra.mxu0 0.0
  %825 = vmatprep.subr.mxu0 0.0
  %826 = vmatpush1.msra.mxu0 0.0
  %827 = vmatprep.subr.mxu0 0.0
  %828 = vmatpush1.msra.mxu0 0.0
  %829 = vmatprep.subr.mxu0 0.0
  %830 = vmatpush1.msra.mxu0 %v193
  %831 = vmatprep.subr.mxu0 0.0
  %832 = vmatpush1.msra.mxu0 %v192
  %833 = vmatprep.subr.mxu0 0.0
  %834 = vmatpush1.msra.mxu0 %v191
  %835 = vmatprep.subr.mxu0 0.0
  %836 = vmatpush1.msra.mxu0 %v190
  %837 = vmatprep.subr.mxu0 0.0
  %838 = vmatpush2.msra.mxu0 0.0
  %839 = vmatprep.subr.mxu0 0.0
  %840 = vmatpush2.msra.mxu0 0.0
  %841 = vmatprep.subr.mxu0 0.0
  %842 = vmatpush2.msra.mxu0 0.0
  %843 = vmatprep.subr.mxu0 0.0
  %844 = vmatpush2.msra.mxu0 0.0
  %845 = vmatprep.subr.mxu0 0.0
  %846 = vmatpush2.msra.mxu0 0.0
  %847 = vmatprep.subr.mxu0 0.0
  %848 = vmatpush2.msra.mxu0 0.0
  %849 = vmatprep.subr.mxu0 0.0
  %850 = vmatpush2.msra.mxu0 0.0
  %851 = vmatprep.subr.mxu0 0.0
  %852 = vmatpush2.msra.mxu0 0.0
  %853 = vmatprep.subr.mxu0 0.0
  %854 = vmatpush2.msra.mxu0 0.0
  %855 = vmatprep.subr.mxu0 0.0
  %856 = vmatpush2.msra.mxu0 0.0
  %857 = vmatprep.subr.mxu0 0.0
  %858 = vmatpush2.msra.mxu0 0.0
  %859 = vmatprep.subr.mxu0 0.0
  %860 = vmatpush2.msra.mxu0 0.0
  %861 = vmatprep.subr.mxu0 0.0
  %862 = vmatpush2.msra.mxu0 0.0
  %863 = vmatprep.subr.mxu0 0.0
  %864 = vmatpush2.msra.mxu0 0.0
  %865 = vmatprep.subr.mxu0 0.0
  %866 = vmatpush2.msra.mxu0 0.0
  %867 = vmatprep.subr.mxu0 0.0
  %868 = vmatpush2.msra.mxu0 0.0
  %869 = vmatprep.mubr.f32.mxu0 0.0
  %870 = vmatmul.mubr.f32.gmra.mxu0 %v803
  %v871 = vpop.f32.mrf.mxu0
  %v872 = vadd.f32 0.0, %v871
  %v873 = vpop.f32.mrf.mxu0
  %874 = vdwg.mxu0
  %v875 = vadd.f32 %v799, %v872
  %v876 = vmul.f32 %v875, 0.5
  %v877 = vtanh.pop %v876
  %v878 = vadd.f32 %v877, 1.0
  %v879 = vmul.f32 %v878, 0.5
  %v880 = vtanh.pop %v875
  %v881 = vmul.f32 %v879, %v791
  %883 = vrot.lane.b32.xlu0 %v880, 64
  %v884 = vpop.permute.xlu0 %883
  %v886 = vmul.f32 %v879, %v884
  %888 = vrot.lane.b32.xlu0 %v886, 32
  %v889 = vpop.permute.xlu0 %888
  %v891 = vadd.f32 %v881, %v889
  %v892 = vtanh.pop %v891
  %894 = vrot.lane.b32.xlu0 %v892, 64
  %v895 = vpop.permute.xlu0 %894
  %v897 = vmul.f32 %v879, %v895
  %s898 = scalar_lea.vmem [#allocation2], 56
  %v899 = vld [vmem:[%s898] sm:$0xff]
  %901 = vrot.lane.b32.xlu0 %v897, 32
  %v902 = vpop.permute.xlu0 %901
  %v903 = vsel %vm197, %v902, 0
  %905 = vmatprep.subr.mxu0 0.0
  %906 = vmatpush1.msra.mxu0 0.0
  %907 = vmatprep.subr.mxu0 0.0
  %908 = vmatpush1.msra.mxu0 0.0
  %909 = vmatprep.subr.mxu0 0.0
  %910 = vmatpush1.msra.mxu0 0.0
  %911 = vmatprep.subr.mxu0 0.0
  %912 = vmatpush1.msra.mxu0 0.0
  %913 = vmatprep.subr.mxu0 0.0
  %914 = vmatpush1.msra.mxu0 0.0
  %915 = vmatprep.subr.mxu0 0.0
  %916 = vmatpush1.msra.mxu0 0.0
  %917 = vmatprep.subr.mxu0 0.0
  %918 = vmatpush1.msra.mxu0 0.0
  %919 = vmatprep.subr.mxu0 0.0
  %920 = vmatpush1.msra.mxu0 0.0
  %921 = vmatprep.subr.mxu0 0.0
  %922 = vmatpush1.msra.mxu0 0.0
  %923 = vmatprep.subr.mxu0 0.0
  %924 = vmatpush1.msra.mxu0 0.0
  %925 = vmatprep.subr.mxu0 0.0
  %926 = vmatpush1.msra.mxu0 0.0
  %927 = vmatprep.subr.mxu0 0.0
  %928 = vmatpush1.msra.mxu0 0.0
  %929 = vmatprep.subr.mxu0 0.0
  %930 = vmatpush1.msra.mxu0 %v193
  %931 = vmatprep.subr.mxu0 0.0
  %932 = vmatpush1.msra.mxu0 %v192
  %933 = vmatprep.subr.mxu0 0.0
  %934 = vmatpush1.msra.mxu0 %v191
  %935 = vmatprep.subr.mxu0 0.0
  %936 = vmatpush1.msra.mxu0 %v190
  %937 = vmatprep.subr.mxu0 0.0
  %938 = vmatpush2.msra.mxu0 0.0
  %939 = vmatprep.subr.mxu0 0.0
  %940 = vmatpush2.msra.mxu0 0.0
  %941 = vmatprep.subr.mxu0 0.0
  %942 = vmatpush2.msra.mxu0 0.0
  %943 = vmatprep.subr.mxu0 0.0
  %944 = vmatpush2.msra.mxu0 0.0
  %945 = vmatprep.subr.mxu0 0.0
  %946 = vmatpush2.msra.mxu0 0.0
  %947 = vmatprep.subr.mxu0 0.0
  %948 = vmatpush2.msra.mxu0 0.0
  %949 = vmatprep.subr.mxu0 0.0
  %950 = vmatpush2.msra.mxu0 0.0
  %951 = vmatprep.subr.mxu0 0.0
  %952 = vmatpush2.msra.mxu0 0.0
  %953 = vmatprep.subr.mxu0 0.0
  %954 = vmatpush2.msra.mxu0 0.0
  %955 = vmatprep.subr.mxu0 0.0
  %956 = vmatpush2.msra.mxu0 0.0
  %957 = vmatprep.subr.mxu0 0.0
  %958 = vmatpush2.msra.mxu0 0.0
  %959 = vmatprep.subr.mxu0 0.0
  %960 = vmatpush2.msra.mxu0 0.0
  %961 = vmatprep.subr.mxu0 0.0
  %962 = vmatpush2.msra.mxu0 0.0
  %963 = vmatprep.subr.mxu0 0.0
  %964 = vmatpush2.msra.mxu0 0.0
  %965 = vmatprep.subr.mxu0 0.0
  %966 = vmatpush2.msra.mxu0 0.0
  %967 = vmatprep.subr.mxu0 0.0
  %968 = vmatpush2.msra.mxu0 0.0
  %969 = vmatprep.mubr.f32.mxu0 0.0
  %970 = vmatmul.mubr.f32.gmra.mxu0 %v903
  %v971 = vpop.f32.mrf.mxu0
  %v972 = vadd.f32 0.0, %v971
  %v973 = vpop.f32.mrf.mxu0
  %974 = vdwg.mxu0
  %v975 = vadd.f32 %v899, %v972
  %v976 = vmul.f32 %v975, 0.5
  %v977 = vtanh.pop %v976
  %v978 = vadd.f32 %v977, 1.0
  %v979 = vmul.f32 %v978, 0.5
  %v980 = vtanh.pop %v975
  %v981 = vmul.f32 %v979, %v891
  %983 = vrot.lane.b32.xlu0 %v980, 64
  %v984 = vpop.permute.xlu0 %983
  %v986 = vmul.f32 %v979, %v984
  %988 = vrot.lane.b32.xlu0 %v986, 32
  %v989 = vpop.permute.xlu0 %988
  %v991 = vadd.f32 %v981, %v989
  %v992 = vtanh.pop %v991
  %994 = vrot.lane.b32.xlu0 %v992, 64
  %v995 = vpop.permute.xlu0 %994
  %v997 = vmul.f32 %v979, %v995
  %999 = vrot.lane.b32.xlu0 %v997, 32
  %v1000 = vpop.permute.xlu0 %999
  %1002 = vst.msk [vmem:[#allocation3] sm:$0xff] %vm197, %v1000
  %1004 = vrot.lane.b32.xlu0 %v991, 96
  %v1005 = vpop.permute.xlu0 %1004
  %1007 = vst.msk [vmem:[#allocation4] sm:$0xff] %vm197, %v1005
  // Predicated region
  $region30: #{tpu_custom_call.1} parent=0 // pred_check
    %p1008 = pneg %p25
  $region31: #{tpu_custom_call.1} parent=0 // pred_check_branch
    %1010 = sbr.rel (%p1008) target = $region33
  $region32: #{tpu_custom_call.1} parent=0 // pred_region
    %v1011 = vld [vmem:[%s4] sm:$0x1]
    %v1013 = vlaneseq
    %v1014 = vshrl.u32 %v1013, 7
    %v1015 = vsub.s32 0, %v1014
    %v1016 = vrot.slane %v1011, %v1015
    %1017 = vrot.lane.b32.xlu0 %v1016, 96
    %v1018 = vpop.permute.xlu0 %1017
    %v1020 = vmul.f32 %v997, %v1018
    %1022 = vrot.lane.b32.xlu0 %v1020, 32
    %v1023 = vpop.permute.xlu0 %1022
    %v1025 = vsel %vm197, %v1023, 0.0
    %1026 = vadd.xlane.f32.xlu0 %v1025
    %v1027 = vpop.xlane.xlu0 %1026
    %v1028 = vld [vmem:[#allocation5] sm:$0x1]
    %v1030 = vlaneseq
    %v1031 = vshrl.u32 %v1030, 7
    %v1032 = vsub.s32 0, %v1031
    %v1033 = vrot.slane %v1028, %v1032
    %v1035 = vadd.f32 %v1027, %v1033
    %vm1036 = vcmask 7168
    %1037 = vst.msk [vmem:[%s6] sm:$0xff] %vm1036, %v1035
  $region33: #{tpu_custom_call.1} parent=0 // pred_fallthru
    _
  // Predicated region
  $region34: #{tpu_custom_call.1} parent=0 // pred_check
    _
  $region35: #{tpu_custom_call.1} parent=0 // pred_check_branch
    %1039 = sbr.rel (0) target = $region37
  $region36: #{tpu_custom_call.1} parent=0 // pred_region
    _
  $region37: #{tpu_custom_call.1} parent=0 // pred_fallthru
    _
  // Predicated region
  $region38: #{tpu_custom_call.1} parent=0 // pred_check
    _
  $region39: #{tpu_custom_call.1} parent=0 // pred_check_branch
    %1041 = sbr.rel (0) target = $region41
  $region40: #{tpu_custom_call.1} parent=0 // pred_region
    _
  $region41: #{tpu_custom_call.1} parent=0 // pred_fallthru
    _

</llo_original>
